<compile_context>
chip_gen: v6e
topology: v6e:2x2x1
jax: 0.10.0
libtpu: 0.0.40
codegen_flags: <defaults>
</compile_context>

<pallas_src>
import functools
import math

import jax
import jax.numpy as jnp
from jax.experimental import pallas as pl
from jax.experimental.pallas import tpu as pltpu


def _attention_kernel(x_ref, wqkv_ref, wo_ref, o_ref, *, nh):
    """x_ref: (bb, T, nx); wqkv_ref: (nx, 3*nh); wo_ref: (nh, n_pad); o_ref: (bb, T, n_pad)."""
    cdt = wqkv_ref.dtype                      # MXU compute dtype (bf16)
    x = x_ref[...]                            # already in compute dtype

    # Fused Q/K/V projection: one wide MXU matmul, f32 accumulation, no reshapes
    # (batched einsum keeps (b, t) un-merged -> no sublane repack when T < 16).
    qkv = jnp.einsum("btx,xc->btc", x, wqkv_ref[...],
                     preferred_element_type=jnp.float32)                  # (bb, T, 3nh)

    # NOTE: lane offsets 0/nh/2*nh are not 128-aligned; per review, verify in the bundle
    # dump that these slices don't materialize cross-lane selects before padding wqkv to
    # 3*128 columns (padding costs extra MXU passes on v5e's 128-wide MXU).
    q = qkv[..., 0 * nh:1 * nh].astype(cdt)   # 1/sqrt(T) already folded into Wq columns
    k = qkv[..., 1 * nh:2 * nh].astype(cdt)
    v = qkv[..., 2 * nh:3 * nh]

    # score[b,h,g] = sum_t q[b,t,h] * k[b,t,g]  == q^T @ k  (transpose folded into the
    # contraction dims; bf16 MXU operands, f32 accumulation).
    score = jnp.einsum("bth,btg->bhg", q, k,
                       preferred_element_type=jnp.float32)                # (bb, nh, nh)

    # Numerically-stable softmax over the last axis (f32); EUP reciprocal.
    score = score - jnp.max(score, axis=-1, keepdims=True)
    p = jnp.exp(score)
    attn = p * pl.reciprocal(jnp.sum(p, axis=-1, keepdims=True), approx=True)

    # out[b,t,h] = sum_g v[b,t,g] * attn[b,h,g]  == (attn @ v^T)^T, transpose-free,
    # bf16 MXU operands, f32 accumulation.
    out = jnp.einsum("btg,bhg->bth", v.astype(cdt), attn.astype(cdt),
                     preferred_element_type=jnp.float32)                  # (bb, T, nh)

    # Output projection against the lane-padded Wo -> lane-dense (128-wide) bf16 store.
    y = jnp.einsum("bth,hn->btn", out.astype(cdt), wo_ref[...],
                   preferred_element_type=jnp.float32)                    # (bb, T, n_pad)
    o_ref[...] = y.astype(o_ref.dtype)


def prepare_attention_weights(w_q, w_k, w_v, w_o, *, seq_len,
                              compute_dtype=jnp.bfloat16):
    """One-time parameter preprocessing (hoisted out of the per-call path).

    Returns (w_qkv, w_o_pad):
      w_qkv   : (nx, 3*nh) bf16, with the 1/sqrt(seq_len) softmax scale folded into
                the Q columns (torch uses d = q.shape[1] == sequence length).
      w_o_pad : (nh, 128*ceil(nh/128)) bf16, zero-padded so the kernel's output store
                is lane-dense (unmasked vst); the padding is sliced off wrapper-side.
    """
    nh = w_q.shape[1]
    n_pad = 128 * pl.cdiv(nh, 128)
    scale = 1.0 / math.sqrt(float(seq_len))
    w_qkv = jnp.concatenate([w_q * scale, w_k, w_v], axis=1).astype(compute_dtype)
    w_o_pad = jnp.pad(w_o, ((0, 0), (0, n_pad - nh))).astype(compute_dtype)
    return w_qkv, w_o_pad


def _pick_block_b(B, T, *, min_rows_per_step=128):
    # Split into >= 2 grid steps only when each step still feeds plenty of MXU rows.
    # Otherwise one step: the grid is a serial loop on single-TC v5e/v6e (each step is
    # ~0.35 us fixed overhead), and on v7x the dual-TC win doesn't pay for tiny blocks.
    if B >= 2 and (B // 2) * T >= min_rows_per_step:
        block_b = B // 2
        while B % block_b:
            block_b -= 1
        return block_b
    return B


def attention_layer(x, w_qkv, w_o_pad, nh, *, out_dtype=jnp.bfloat16, block_b=None):
    """x: (B, T, nx); w_qkv: (nx, 3*nh); w_o_pad: (nh, n_pad) -> (B, T, nh) in out_dtype."""
    B, T, nx = x.shape
    n_pad = w_o_pad.shape[1]

    if block_b is None:
        block_b = _pick_block_b(B, T)
    grid_b = B // block_b

    kernel = functools.partial(_attention_kernel, nh=nh)

    out_padded = pl.pallas_call(
        kernel,
        out_shape=jax.ShapeDtypeStruct((B, T, n_pad), out_dtype),
        grid_spec=pltpu.PrefetchScalarGridSpec(
            num_scalar_prefetch=0,
            grid=(grid_b,),
            in_specs=[
                pl.BlockSpec((block_b, T, nx), lambda b: (b, 0, 0)),
                pl.BlockSpec(w_qkv.shape, lambda b: (0, 0)),    # resident, fetched once
                pl.BlockSpec(w_o_pad.shape, lambda b: (0, 0)),  # resident, fetched once
            ],
            out_specs=pl.BlockSpec((block_b, T, n_pad), lambda b: (b, 0, 0)),
        ),
        compiler_params=pltpu.CompilerParams(
            dimension_semantics=("parallel",),
            # Blocks are tiny here. If T/nx/nh/block_b scale up, size against v7x's
            # 32 MiB scoped VMEM (v5e: 16 MiB) with roughly
            #   2*block_b*T*(2*nx + 2*n_pad) + 2*nx*3*nh + 2*nh*n_pad  bytes (bf16)
            # and set vmem_limit_bytes explicitly.
        ),
    )(x.astype(w_qkv.dtype), w_qkv, w_o_pad)

    return out_padded[..., :nh]


def _reference(x, w_q, w_k, w_v, w_o):
    q = x @ w_q
    k = x @ w_k
    v = x @ w_v
    d = q.shape[1]                            # == T, matching torch's q.shape[1]
    score = jnp.einsum("bth,btg->bhg", q, k) / math.sqrt(d)
    attn = jax.nn.softmax(score, axis=-1)
    out = jnp.einsum("bhg,btg->bht", attn, v)
    out = jnp.einsum("bht,hg->btg", out, w_o)
    return out


if __name__ == "__main__":
    key = jax.random.PRNGKey(0)
    # FinalModel uses AttentionLayer(nh, nh), so nx == nh; T is the encoder seq length.
    B, T, NX, NH = 2, 8, 32, 32

    kx, kq, kk, kv, ko = jax.random.split(key, 5)
    x = jax.random.normal(kx, (B, T, NX), dtype=jnp.float32)

    # Xavier-uniform-like init, as in FinalModel's parameter init loop.
    bound_in = math.sqrt(6.0 / (NX + NH))
    bound_h = math.sqrt(6.0 / (NH + NH))
    w_q = jax.random.uniform(kq, (NX, NH), jnp.float32, -bound_in, bound_in)
    w_k = jax.random.uniform(kk, (NX, NH), jnp.float32, -bound_in, bound_in)
    w_v = jax.random.uniform(kv, (NX, NH), jnp.float32, -bound_in, bound_in)
    w_o = jax.random.uniform(ko, (NH, NH), jnp.float32, -bound_h, bound_h)

    # One-time weight prep (fusion + padding + scale fold), outside the per-call path.
    w_qkv, w_o_pad = prepare_attention_weights(w_q, w_k, w_v, w_o, seq_len=T)
    w_qkv = jax.block_until_ready(w_qkv)
    w_o_pad = jax.block_until_ready(w_o_pad)

    fwd = jax.jit(functools.partial(attention_layer, nh=NH))
    out = fwd(x, w_qkv, w_o_pad)              # bf16 operands/output, f32 accum/softmax
    out = jax.block_until_ready(out)

    ref = _reference(x, w_q, w_k, w_v, w_o)   # pure f32 reference
    assert out.shape == (B, T, NH)
    out_f32 = out.astype(jnp.float32)
    max_err = float(jnp.max(jnp.abs(out_f32 - ref)))
    # Tolerance sized for bf16 MXU operands throughout + bf16 output store.
    assert jnp.allclose(out_f32, ref, atol=5e-2, rtol=5e-2), max_err

    print("KERNEL_OK")
</pallas_src>

<mosaic_0001>
module attributes {stable_mosaic.version = 11 : i64} {
  func.func @_attention_kernel(%arg0: i32, %arg1: memref<2x8x32xbf16, #tpu.memory_space<vmem>>, %arg2: memref<32x96xbf16, #tpu.memory_space<vmem>>, %arg3: memref<32x128xbf16, #tpu.memory_space<vmem>>, %arg4: memref<2x8x128xbf16, #tpu.memory_space<vmem>>) attributes {dimension_semantics = [#tpu.dimension_semantics<parallel>], iteration_bounds = array<i64: 1>, scalar_prefetch = 0 : i64, scratch_operands = 0 : i64, tpu.core_type = #tpu.core_type<tc>, window_params = [{transform_indices = @transform_0, window_bounds = array<i64: 2, 8, 32>}, {pipeline_mode = #tpu.pipeline_mode<synchronous>, transform_indices = @transform_1, window_bounds = array<i64: 32, 96>}, {pipeline_mode = #tpu.pipeline_mode<synchronous>, transform_indices = @transform_2, window_bounds = array<i64: 32, 128>}, {transform_indices = @transform_3, window_bounds = array<i64: 2, 8, 128>}]} {
    %c0 = arith.constant 0 : index
    %c0_0 = arith.constant 0 : index
    %c0_1 = arith.constant 0 : index
    %0 = vector.load %arg1[%c0, %c0_0, %c0_1] : memref<2x8x32xbf16, #tpu.memory_space<vmem>>, vector<2x8x32xbf16>
    %c0_2 = arith.constant 0 : index
    %c0_3 = arith.constant 0 : index
    %1 = vector.load %arg2[%c0_2, %c0_3] : memref<32x96xbf16, #tpu.memory_space<vmem>>, vector<32x96xbf16>
    "tpu.trace_start"() <{level = 10 : i32, message = "btx,xc->btc"}> : () -> ()
    %cst = arith.constant dense<0.000000e+00> : vector<2x8x96xf32>
    %2 = tpu.matmul %0, %1, %cst {dimension_numbers = #tpu.dot_dimension_numbers<[2], [0], [0, 1], [1], [0, 0, 0, 1, 1, 1], [], []>} : vector<2x8x32xbf16>, vector<32x96xbf16>, vector<2x8x96xf32> -> vector<2x8x96xf32>
    "tpu.trace_stop"() : () -> ()
    %3 = vector.extract_strided_slice %2 {offsets = [0, 0, 0], sizes = [2, 8, 32], strides = [1, 1, 1]} : vector<2x8x96xf32> to vector<2x8x32xf32>
    %4 = arith.truncf %3 : vector<2x8x32xf32> to vector<2x8x32xbf16>
    %5 = vector.extract_strided_slice %2 {offsets = [0, 0, 32], sizes = [2, 8, 32], strides = [1, 1, 1]} : vector<2x8x96xf32> to vector<2x8x32xf32>
    %6 = arith.truncf %5 : vector<2x8x32xf32> to vector<2x8x32xbf16>
    %7 = vector.extract_strided_slice %2 {offsets = [0, 0, 64], sizes = [2, 8, 32], strides = [1, 1, 1]} : vector<2x8x96xf32> to vector<2x8x32xf32>
    "tpu.trace_start"() <{level = 10 : i32, message = "bth,btg->bhg"}> : () -> ()
    %cst_4 = arith.constant dense<0.000000e+00> : vector<2x32x32xf32>
    %8 = tpu.matmul %4, %6, %cst_4 {dimension_numbers = #tpu.dot_dimension_numbers<[1], [1], [2], [2], [0, 0, 0, 2, 1, 2], [0], [0]>} : vector<2x8x32xbf16>, vector<2x8x32xbf16>, vector<2x32x32xf32> -> vector<2x32x32xf32>
    "tpu.trace_stop"() : () -> ()
    %cst_5 = arith.constant dense<0xFF800000> : vector<2x32xf32>
    %9 = vector.multi_reduction <maximumf>, %8, %cst_5 [2] : vector<2x32x32xf32> to vector<2x32xf32>
    %10 = vector.shape_cast %9 : vector<2x32xf32> to vector<2x32x1xf32>
    %11 = vector.broadcast %10 : vector<2x32x1xf32> to vector<2x32x32xf32>
    %12 = arith.subf %8, %11 : vector<2x32x32xf32>
    %13 = math.exp %12 : vector<2x32x32xf32>
    %cst_6 = arith.constant dense<0.000000e+00> : vector<2x32xf32>
    %14 = vector.multi_reduction <add>, %13, %cst_6 [2] : vector<2x32x32xf32> to vector<2x32xf32>
    %15 = vector.shape_cast %14 : vector<2x32xf32> to vector<2x32x1xf32>
    %16 = tpu.reciprocal %15 {approx = true} : vector<2x32x1xf32> -> vector<2x32x1xf32>
    %17 = vector.broadcast %16 : vector<2x32x1xf32> to vector<2x32x32xf32>
    %18 = arith.mulf %13, %17 : vector<2x32x32xf32>
    %19 = arith.truncf %7 : vector<2x8x32xf32> to vector<2x8x32xbf16>
    %20 = arith.truncf %18 : vector<2x32x32xf32> to vector<2x32x32xbf16>
    "tpu.trace_start"() <{level = 10 : i32, message = "btg,bhg->bth"}> : () -> ()
    %cst_7 = arith.constant dense<0.000000e+00> : vector<2x8x32xf32>
    %21 = tpu.matmul %19, %20, %cst_7 {dimension_numbers = #tpu.dot_dimension_numbers<[2], [2], [1], [1], [0, 0, 0, 1, 1, 1], [0], [0]>} : vector<2x8x32xbf16>, vector<2x32x32xbf16>, vector<2x8x32xf32> -> vector<2x8x32xf32>
    "tpu.trace_stop"() : () -> ()
    %22 = arith.truncf %21 : vector<2x8x32xf32> to vector<2x8x32xbf16>
    %c0_8 = arith.constant 0 : index
    %c0_9 = arith.constant 0 : index
    %23 = vector.load %arg3[%c0_8, %c0_9] : memref<32x128xbf16, #tpu.memory_space<vmem>>, vector<32x128xbf16>
    "tpu.trace_start"() <{level = 10 : i32, message = "bth,hn->btn"}> : () -> ()
    %cst_10 = arith.constant dense<0.000000e+00> : vector<2x8x128xf32>
    %24 = tpu.matmul %22, %23, %cst_10 {dimension_numbers = #tpu.dot_dimension_numbers<[2], [0], [0, 1], [1], [0, 0, 0, 1, 1, 1], [], []>} : vector<2x8x32xbf16>, vector<32x128xbf16>, vector<2x8x128xf32> -> vector<2x8x128xf32>
    "tpu.trace_stop"() : () -> ()
    %25 = arith.truncf %24 : vector<2x8x128xf32> to vector<2x8x128xbf16>
    %c0_11 = arith.constant 0 : index
    %c0_12 = arith.constant 0 : index
    %c0_13 = arith.constant 0 : index
    %26 = vector.load %arg4[%c0_11, %c0_12, %c0_13] : memref<2x8x128xbf16, #tpu.memory_space<vmem>>, vector<2x8x128xbf16>
    tpu.vector_store %arg4[%c0_11, %c0_12, %c0_13], %25 {strides = array<i32>} : memref<2x8x128xbf16, #tpu.memory_space<vmem>>, vector<2x8x128xbf16>,
    return
  }
  func.func @transform_0(%arg0: i32) -> (i32, i32, i32) {
    %c0_i32 = arith.constant 0 : i32
    %c0_i32_0 = arith.constant 0 : i32
    %c0_i32_1 = arith.constant 0 : i32
    return %arg0, %c0_i32, %c0_i32_0 : i32, i32, i32
  }
  func.func @transform_1(%arg0: i32) -> (i32, i32) {
    %c0_i32 = arith.constant 0 : i32
    %c0_i32_0 = arith.constant 0 : i32
    %c0_i32_1 = arith.constant 0 : i32
    return %c0_i32, %c0_i32_0 : i32, i32
  }
  func.func @transform_2(%arg0: i32) -> (i32, i32) {
    %c0_i32 = arith.constant 0 : i32
    %c0_i32_0 = arith.constant 0 : i32
    %c0_i32_1 = arith.constant 0 : i32
    return %c0_i32, %c0_i32_0 : i32, i32
  }
  func.func @transform_3(%arg0: i32) -> (i32, i32, i32) {
    %c0_i32 = arith.constant 0 : i32
    %c0_i32_0 = arith.constant 0 : i32
    %c0_i32_1 = arith.constant 0 : i32
    return %arg0, %c0_i32, %c0_i32_0 : i32, i32, i32
  }
}

</mosaic_0001>

<llo_original>
// kernel: attention_layer.1
$region0: #{attention_layer.1}
  #allocation0 [shape = 'u32[]', space=smem, size = 0x4, offset = 0x4, fixed_abs, tag = 'smem constant byte address 0x4 - core index']
  #allocation1 [shape = 'u32[144,128]{1,0:T(1,128)}', space=vmem, size = 0x12000, scoped, tag = 'internal scratch']
  %s0 = inlined_call_operand.vmem [shape: bf16[2,8,32], index: 0, kind: input, shape index: {}]
  %s1 = inlined_call_operand.vmem [shape: bf16[32,96], index: 1, kind: input, shape index: {}]
  %s2 = inlined_call_operand.hbm [shape: bf16[32,128], index: 2, kind: input, shape index: {}]
  %s3 = inlined_call_operand.hbm [shape: bf16[2,8,128], index: 3, kind: output, shape index: {}]
  %s4 = sld [smem:[#allocation0]]
  $region26: #{attention_layer.1} parent=0
    _
  %s6 = ssub.s32 1, %s4
  %s7 = scalar_select 0, %s6, %s4
  $region1: #{attention_layer.1} parent=0
    #allocation2 [shape = 'u8[8192]{0}', space=vmem, size = 0x2000, scoped, tag = 'input window, operand 2, single buffered']
    #allocation3 [shape = 's32[1]{0}', space=sflag, size = 0x4, scoped, tag = 'scoped memory for attention_layer.1']
    #allocation4 [shape = 's32[1]{0}', space=sflag, size = 0x4, scoped, tag = 'scoped memory for attention_layer.1']
    #allocation5 [shape = 'u8[4096]{0}', space=vmem, size = 0x1000, scoped, tag = 'output window, operand 0, single buffered']
    %8 = vsyncpa [#allocation3], 0
    %9 = vsyncpa [#allocation4], 0
    // Predicated region
    $region2: #{attention_layer.1} parent=1 // pred_check
      _
    $region3: #{attention_layer.1} parent=1 // pred_check_branch
      %11 = sbr.rel (0) target = $region5
    $region4: #{attention_layer.1} parent=1 // pred_region
      _
    $region5: #{attention_layer.1} parent=1 // pred_fallthru
      _
    // Predicated region
    $region6: #{attention_layer.1} parent=1 // pred_check
      _
    $region7: #{attention_layer.1} parent=1 // pred_check_branch
      %13 = sbr.rel (0) target = $region9
    $region8: #{attention_layer.1} parent=1 // pred_region
      _
    $region9: #{attention_layer.1} parent=1 // pred_fallthru
      _
    // Predicated region
    $region10: #{attention_layer.1} parent=1 // pred_check
      _
    $region11: #{attention_layer.1} parent=1 // pred_check_branch
      %15 = sbr.rel (0) target = $region13
    $region12: #{attention_layer.1} parent=1 // pred_region
      %s17 = ssub.s32 256, 256
      %18 = vsyncadd [#allocation3], %s17
      %s19 = sshll.u32 [#allocation2], 4
      %s20 = int_to_ptr.vmem [resolvable:$true] %s19
      %25 = dma.hbm_to_vmem [thread:$0]  %s2, 256, %s20, [#allocation3], 64, 64, 4
    $region13: #{attention_layer.1} parent=1 // pred_fallthru
      _
    // Predicated region
    $region14: #{attention_layer.1} parent=1 // pred_check
      _
    $region15: #{attention_layer.1} parent=1 // pred_check_branch
      %27 = sbr.rel (0) target = $region17
    $region16: #{attention_layer.1} parent=1 // pred_region
      %28 = dma.done [#allocation3], 256
    $region17: #{attention_layer.1} parent=1 // pred_fallthru
      _
    %v30 = vld [vmem:[%s0] sm:$0xf]
    %v31 = vld [vmem:[%s0 + $0x4] sm:$0xf]
    %v32 = vld [vmem:[%s1] sm:$0xf]
    %v33 = vld [vmem:[%s1 + $0x4] sm:$0xf]
    %v34 = vld [vmem:[%s1 + $0x8] sm:$0xf]
    %v35 = vld [vmem:[%s1 + $0xc] sm:$0xf]
    %v38 = vunpack.c.l.b16 %v30
    %v39 = vunpack.c.l.b16 %v31
    %v40 = vpack.c.b16 %v39, %v38
    %v45 = vunpack.c.l.b16 %v32
    %v46 = vunpack.c.l.b16 %v33
    %v47 = vunpack.c.l.b16 %v34
    %v48 = vunpack.c.l.b16 %v35
    %v49 = vpack.c.b16 %v46, %v45
    %v50 = vpack.c.b16 %v48, %v47
    %vm53 = vcmask 261120
    %v55 = vsel %vm53, %v40, 0
    %57 = vmatprep.subr.bf16.mxu0 0
    %58 = vmatpush1.bf16.msra.mxu0 0
    %59 = vmatprep.subr.bf16.mxu0 0
    %60 = vmatpush1.bf16.msra.mxu0 0
    %61 = vmatprep.subr.bf16.mxu0 0
    %62 = vmatpush1.bf16.msra.mxu0 0
    %63 = vmatprep.subr.bf16.mxu0 0
    %64 = vmatpush1.bf16.msra.mxu0 0
    %65 = vmatprep.subr.bf16.mxu0 0
    %66 = vmatpush1.bf16.msra.mxu0 0
    %67 = vmatprep.subr.bf16.mxu0 0
    %68 = vmatpush1.bf16.msra.mxu0 0
    %69 = vmatprep.subr.bf16.mxu0 0
    %70 = vmatpush1.bf16.msra.mxu0 %v50
    %71 = vmatprep.subr.bf16.mxu0 0
    %72 = vmatpush1.bf16.msra.mxu0 %v49
    %73 = vmatprep.subr.bf16.mxu0 0
    %74 = vmatpush2.bf16.msra.mxu0 0
    %75 = vmatprep.subr.bf16.mxu0 0
    %76 = vmatpush2.bf16.msra.mxu0 0
    %77 = vmatprep.subr.bf16.mxu0 0
    %78 = vmatpush2.bf16.msra.mxu0 0
    %79 = vmatprep.subr.bf16.mxu0 0
    %80 = vmatpush2.bf16.msra.mxu0 0
    %81 = vmatprep.subr.bf16.mxu0 0
    %82 = vmatpush2.bf16.msra.mxu0 0
    %83 = vmatprep.subr.bf16.mxu0 0
    %84 = vmatpush2.bf16.msra.mxu0 0
    %85 = vmatprep.subr.bf16.mxu0 0
    %86 = vmatpush2.bf16.msra.mxu0 0
    %87 = vmatprep.subr.bf16.mxu0 0
    %88 = vmatpush2.bf16.msra.mxu0 0
    %89 = vmatprep.mubr.bf16.mxu0 0
    %90 = vmatmul.mubr.bf16.gmra.mxu0 %v55
    %v91 = vpop.f32.mrf.mxu0
    %v92 = vadd.f32 0.0, %v91
    %v93 = vpop.f32.mrf.mxu0
    %v94 = vpop.f32.mrf.mxu0
    %v95 = vadd.f32 0.0, %v94
    %v96 = vpop.f32.mrf.mxu0
    %97 = vdwg.mxu0
    %v98 = vpack.c.bf16 %v92, %v92
    %v99 = vpack.c.bf16 %v95, %v95
    %100 = vxpose.xlu0.c.b16.start [1/8] %v98, 128
    %101 = vxpose.xlu0.c.b16.cont [2/8] 0, 128
    %102 = vxpose.xlu0.c.b16.cont [3/8] 0, 128
    %103 = vxpose.xlu0.c.b16.cont [4/8] 0, 128
    %104 = vxpose.xlu0.c.b16.cont [5/8] 0, 128
    %105 = vxpose.xlu0.c.b16.cont [6/8] 0, 128
    %106 = vxpose.xlu0.c.b16.cont [7/8] 0, 128
    %107 = vxpose.xlu0.c.b16.end [8/8] 0, 128
    %v108 = vpop.trf.xlu0
    %v109 = vpop.trf.xlu0
    %v110 = vpop.trf.xlu0
    %v111 = vpop.trf.xlu0
    %v112 = vpop.trf.xlu0
    %v113 = vpop.trf.xlu0
    %v114 = vpop.trf.xlu0
    %v115 = vpop.trf.xlu0
    %117 = vrot.lane.b32.xlu0 %v98, 96
    %v118 = vpop.permute.xlu0 %117
    %vm119 = vcmask 64512
    %v121 = vsel %vm119, %v108, 0
    %v124 = vsel %vm119, %v109, 0
    %vm126 = vcmask 1043456
    %v128 = vsel %vm126, %v118, 0
    %130 = vmatprep.subr.bf16.mxu0 0
    %131 = vmatpush1.bf16.msra.mxu0 0
    %132 = vmatprep.subr.bf16.mxu0 0
    %133 = vmatpush1.bf16.msra.mxu0 0
    %134 = vmatprep.subr.bf16.mxu0 0
    %135 = vmatpush1.bf16.msra.mxu0 0
    %136 = vmatprep.subr.bf16.mxu0 0
    %137 = vmatpush1.bf16.msra.mxu0 0
    %138 = vmatprep.subr.bf16.mxu0 0
    %139 = vmatpush1.bf16.msra.mxu0 0
    %140 = vmatprep.subr.bf16.mxu0 0
    %141 = vmatpush1.bf16.msra.mxu0 0
    %142 = vmatprep.subr.bf16.mxu0 0
    %143 = vmatpush1.bf16.msra.mxu0 0
    %144 = vmatprep.subr.bf16.mxu0 0
    %145 = vmatpush1.bf16.msra.mxu0 %v128
    %146 = vmatprep.subr.bf16.mxu0 0
    %147 = vmatpush2.bf16.msra.mxu0 0
    %148 = vmatprep.subr.bf16.mxu0 0
    %149 = vmatpush2.bf16.msra.mxu0 0
    %150 = vmatprep.subr.bf16.mxu0 0
    %151 = vmatpush2.bf16.msra.mxu0 0
    %152 = vmatprep.subr.bf16.mxu0 0
    %153 = vmatpush2.bf16.msra.mxu0 0
    %154 = vmatprep.subr.bf16.mxu0 0
    %155 = vmatpush2.bf16.msra.mxu0 0
    %156 = vmatprep.subr.bf16.mxu0 0
    %157 = vmatpush2.bf16.msra.mxu0 0
    %158 = vmatprep.subr.bf16.mxu0 0
    %159 = vmatpush2.bf16.msra.mxu0 0
    %160 = vmatprep.subr.bf16.mxu0 0
    %161 = vmatpush2.bf16.msra.mxu0 0
    %162 = vmatprep.mubr.bf16.mxu0 0
    %163 = vmatmul.mubr.bf16.gmra.mxu0 %v121
    %v164 = vpop.f32.mrf.mxu0
    %v165 = vadd.f32 0.0, %v164
    %v166 = vpop.f32.mrf.mxu0
    %v167 = vpop.f32.mrf.mxu0
    %v168 = vadd.f32 0.0, %v167
    %v169 = vpop.f32.mrf.mxu0
    %170 = vmatprep.mubr.bf16.mxu0 0
    %171 = vmatmul.mubr.bf16.gmra.mxu0 %v124
    %v172 = vpop.f32.mrf.mxu0
    %v173 = vadd.f32 0.0, %v172
    %v174 = vpop.f32.mrf.mxu0
    %v175 = vpop.f32.mrf.mxu0
    %v176 = vadd.f32 0.0, %v175
    %v177 = vpop.f32.mrf.mxu0
    %178 = vdwg.mxu0
    %179 = vxpose.xlu0.c.b16.start [1/8] %v99, 128
    %180 = vxpose.xlu0.c.b16.cont [2/8] 0, 128
    %181 = vxpose.xlu0.c.b16.cont [3/8] 0, 128
    %182 = vxpose.xlu0.c.b16.cont [4/8] 0, 128
    %183 = vxpose.xlu0.c.b16.cont [5/8] 0, 128
    %184 = vxpose.xlu0.c.b16.cont [6/8] 0, 128
    %185 = vxpose.xlu0.c.b16.cont [7/8] 0, 128
    %186 = vxpose.xlu0.c.b16.end [8/8] 0, 128
    %v187 = vpop.trf.xlu0
    %v188 = vpop.trf.xlu0
    %v189 = vpop.trf.xlu0
    %v190 = vpop.trf.xlu0
    %v191 = vpop.trf.xlu0
    %v192 = vpop.trf.xlu0
    %v193 = vpop.trf.xlu0
    %v194 = vpop.trf.xlu0
    %196 = vrot.lane.b32.xlu0 %v99, 96
    %v197 = vpop.permute.xlu0 %196
    %v199 = vsel %vm119, %v187, 0
    %v202 = vsel %vm119, %v188, 0
    %v205 = vsel %vm126, %v197, 0
    %207 = vmatprep.subr.bf16.mxu0 0
    %208 = vmatpush1.bf16.msra.mxu0 0
    %209 = vmatprep.subr.bf16.mxu0 0
    %210 = vmatpush1.bf16.msra.mxu0 0
    %211 = vmatprep.subr.bf16.mxu0 0
    %212 = vmatpush1.bf16.msra.mxu0 0
    %213 = vmatprep.subr.bf16.mxu0 0
    %214 = vmatpush1.bf16.msra.mxu0 0
    %215 = vmatprep.subr.bf16.mxu0 0
    %216 = vmatpush1.bf16.msra.mxu0 0
    %217 = vmatprep.subr.bf16.mxu0 0
    %218 = vmatpush1.bf16.msra.mxu0 0
    %219 = vmatprep.subr.bf16.mxu0 0
    %220 = vmatpush1.bf16.msra.mxu0 0
    %221 = vmatprep.subr.bf16.mxu0 0
    %222 = vmatpush1.bf16.msra.mxu0 %v205
    %223 = vmatprep.subr.bf16.mxu0 0
    %224 = vmatpush2.bf16.msra.mxu0 0
    %225 = vmatprep.subr.bf16.mxu0 0
    %226 = vmatpush2.bf16.msra.mxu0 0
    %227 = vmatprep.subr.bf16.mxu0 0
    %228 = vmatpush2.bf16.msra.mxu0 0
    %229 = vmatprep.subr.bf16.mxu0 0
    %230 = vmatpush2.bf16.msra.mxu0 0
    %231 = vmatprep.subr.bf16.mxu0 0
    %232 = vmatpush2.bf16.msra.mxu0 0
    %233 = vmatprep.subr.bf16.mxu0 0
    %234 = vmatpush2.bf16.msra.mxu0 0
    %235 = vmatprep.subr.bf16.mxu0 0
    %236 = vmatpush2.bf16.msra.mxu0 0
    %237 = vmatprep.subr.bf16.mxu0 0
    %238 = vmatpush2.bf16.msra.mxu0 0
    %239 = vmatprep.mubr.bf16.mxu0 0
    %240 = vmatmul.mubr.bf16.gmra.mxu0 %v199
    %v241 = vpop.f32.mrf.mxu0
    %v242 = vadd.f32 0.0, %v241
    %v243 = vpop.f32.mrf.mxu0
    %v244 = vpop.f32.mrf.mxu0
    %v245 = vadd.f32 0.0, %v244
    %v246 = vpop.f32.mrf.mxu0
    %247 = vmatprep.mubr.bf16.mxu0 0
    %248 = vmatmul.mubr.bf16.gmra.mxu0 %v202
    %v249 = vpop.f32.mrf.mxu0
    %v250 = vadd.f32 0.0, %v249
    %v251 = vpop.f32.mrf.mxu0
    %v252 = vpop.f32.mrf.mxu0
    %v253 = vadd.f32 0.0, %v252
    %v254 = vpop.f32.mrf.mxu0
    %255 = vdwg.mxu0
    %v256 = vsel %vm53, %v165, -inf
    %257 = vmax.xlane.f32.xlu0 %v256
    %v258 = vpop.xlane.xlu0 %257
    %v259 = vsel %vm53, %v168, -inf
    %260 = vmax.xlane.f32.xlu0 %v259
    %v261 = vpop.xlane.xlu0 %260
    %v262 = vsel %vm53, %v173, -inf
    %263 = vmax.xlane.f32.xlu0 %v262
    %v264 = vpop.xlane.xlu0 %263
    %v265 = vsel %vm53, %v176, -inf
    %266 = vmax.xlane.f32.xlu0 %v265
    %v267 = vpop.xlane.xlu0 %266
    %v268 = vsel %vm53, %v242, -inf
    %269 = vmax.xlane.f32.xlu0 %v268
    %v270 = vpop.xlane.xlu0 %269
    %v271 = vsel %vm53, %v245, -inf
    %272 = vmax.xlane.f32.xlu0 %v271
    %v273 = vpop.xlane.xlu0 %272
    %v274 = vsel %vm53, %v250, -inf
    %275 = vmax.xlane.f32.xlu0 %v274
    %v276 = vpop.xlane.xlu0 %275
    %v277 = vsel %vm53, %v253, -inf
    %278 = vmax.xlane.f32.xlu0 %v277
    %v279 = vpop.xlane.xlu0 %278
    %v280 = vsub.f32 %v165, %v258
    %v281 = vsub.f32 %v168, %v261
    %v282 = vsub.f32 %v173, %v264
    %v283 = vsub.f32 %v176, %v267
    %v284 = vsub.f32 %v242, %v270
    %v285 = vsub.f32 %v245, %v273
    %v286 = vsub.f32 %v250, %v276
    %v287 = vsub.f32 %v253, %v279
    %v288 = vmul.f32 %v280, 1.442695
    %v289 = vpow.pop %v288
    %v290 = vmul.f32 %v281, 1.442695
    %v291 = vpow.pop %v290
    %v292 = vmul.f32 %v282, 1.442695
    %v293 = vpow.pop %v292
    %v294 = vmul.f32 %v283, 1.442695
    %v295 = vpow.pop %v294
    %v296 = vmul.f32 %v284, 1.442695
    %v297 = vpow.pop %v296
    %v298 = vmul.f32 %v285, 1.442695
    %v299 = vpow.pop %v298
    %v300 = vmul.f32 %v286, 1.442695
    %v301 = vpow.pop %v300
    %v302 = vmul.f32 %v287, 1.442695
    %v303 = vpow.pop %v302
    %v304 = vsel %vm53, %v289, 0.0
    %305 = vadd.xlane.f32.xlu0 %v304
    %v306 = vpop.xlane.xlu0 %305
    %v307 = vsel %vm53, %v291, 0.0
    %308 = vadd.xlane.f32.xlu0 %v307
    %v309 = vpop.xlane.xlu0 %308
    %v310 = vsel %vm53, %v293, 0.0
    %311 = vadd.xlane.f32.xlu0 %v310
    %v312 = vpop.xlane.xlu0 %311
    %v313 = vsel %vm53, %v295, 0.0
    %314 = vadd.xlane.f32.xlu0 %v313
    %v315 = vpop.xlane.xlu0 %314
    %v316 = vsel %vm53, %v297, 0.0
    %317 = vadd.xlane.f32.xlu0 %v316
    %v318 = vpop.xlane.xlu0 %317
    %v319 = vsel %vm53, %v299, 0.0
    %320 = vadd.xlane.f32.xlu0 %v319
    %v321 = vpop.xlane.xlu0 %320
    %v322 = vsel %vm53, %v301, 0.0
    %323 = vadd.xlane.f32.xlu0 %v322
    %v324 = vpop.xlane.xlu0 %323
    %v325 = vsel %vm53, %v303, 0.0
    %326 = vadd.xlane.f32.xlu0 %v325
    %v327 = vpop.xlane.xlu0 %326
    %v328 = vrcp.pop %v306
    %v329 = vrcp.pop %v309
    %v330 = vrcp.pop %v312
    %v331 = vrcp.pop %v315
    %v332 = vrcp.pop %v318
    %v333 = vrcp.pop %v321
    %v334 = vrcp.pop %v324
    %v335 = vrcp.pop %v327
    %v336 = vmul.f32 %v289, %v328
    %v337 = vmul.f32 %v291, %v329
    %v338 = vmul.f32 %v293, %v330
    %v339 = vmul.f32 %v295, %v331
    %v340 = vmul.f32 %v297, %v332
    %v341 = vmul.f32 %v299, %v333
    %v342 = vmul.f32 %v301, %v334
    %v343 = vmul.f32 %v303, %v335
    %v344 = vpack.c.bf16 %v337, %v336
    %v345 = vpack.c.bf16 %v339, %v338
    %v346 = vpack.c.bf16 %v341, %v340
    %v347 = vpack.c.bf16 %v343, %v342
    %348 = vrot.lane.b32.xlu0 %v98, 64
    %v349 = vpop.permute.xlu0 %348
    %v351 = vsel %vm53, %v349, 0
    %v354 = vsel %vm53, %v344, 0
    %v357 = vsel %vm53, %v345, 0
    %359 = vmatprep.subr.bf16.mxu0 0
    %360 = vmatpush1.bf16.xpose.msra.mxu0 0
    %361 = vmatprep.subr.bf16.mxu0 0
    %362 = vmatpush1.bf16.xpose.msra.mxu0 0
    %363 = vmatprep.subr.bf16.mxu0 0
    %364 = vmatpush1.bf16.xpose.msra.mxu0 0
    %365 = vmatprep.subr.bf16.mxu0 0
    %366 = vmatpush1.bf16.xpose.msra.mxu0 0
    %367 = vmatprep.subr.bf16.mxu0 0
    %368 = vmatpush1.bf16.xpose.msra.mxu0 0
    %369 = vmatprep.subr.bf16.mxu0 0
    %370 = vmatpush1.bf16.xpose.msra.mxu0 0
    %371 = vmatprep.subr.bf16.mxu0 0
    %372 = vmatpush1.bf16.xpose.msra.mxu0 %v357
    %373 = vmatprep.subr.bf16.mxu0 0
    %374 = vmatpush1.bf16.xpose.msra.mxu0 %v354
    %375 = vmatprep.subr.bf16.mxu0 0
    %376 = vmatpush2.bf16.xpose.msra.mxu0 0
    %377 = vmatprep.subr.bf16.mxu0 0
    %378 = vmatpush2.bf16.xpose.msra.mxu0 0
    %379 = vmatprep.subr.bf16.mxu0 0
    %380 = vmatpush2.bf16.xpose.msra.mxu0 0
    %381 = vmatprep.subr.bf16.mxu0 0
    %382 = vmatpush2.bf16.xpose.msra.mxu0 0
    %383 = vmatprep.subr.bf16.mxu0 0
    %384 = vmatpush2.bf16.xpose.msra.mxu0 0
    %385 = vmatprep.subr.bf16.mxu0 0
    %386 = vmatpush2.bf16.xpose.msra.mxu0 0
    %387 = vmatprep.subr.bf16.mxu0 0
    %388 = vmatpush2.bf16.xpose.msra.mxu0 0
    %389 = vmatprep.subr.bf16.mxu0 0
    %390 = vmatpush2.bf16.xpose.msra.mxu0 0
    %391 = vmatprep.mubr.bf16.mxu0 0
    %392 = vmatmul.mubr.bf16.gmra.mxu0 %v351
    %v393 = vpop.f32.mrf.mxu0
    %v394 = vadd.f32 0.0, %v393
    %v395 = vpop.f32.mrf.mxu0
    %v396 = vpop.f32.mrf.mxu0
    %v397 = vpop.f32.mrf.mxu0
    %398 = vdwg.mxu0
    %399 = vrot.lane.b32.xlu0 %v99, 64
    %v400 = vpop.permute.xlu0 %399
    %v402 = vsel %vm53, %v400, 0
    %v405 = vsel %vm53, %v346, 0
    %v408 = vsel %vm53, %v347, 0
    %410 = vmatprep.subr.bf16.mxu0 0
    %411 = vmatpush1.bf16.xpose.msra.mxu0 0
    %412 = vmatprep.subr.bf16.mxu0 0
    %413 = vmatpush1.bf16.xpose.msra.mxu0 0
    %414 = vmatprep.subr.bf16.mxu0 0
    %415 = vmatpush1.bf16.xpose.msra.mxu0 0
    %416 = vmatprep.subr.bf16.mxu0 0
    %417 = vmatpush1.bf16.xpose.msra.mxu0 0
    %418 = vmatprep.subr.bf16.mxu0 0
    %419 = vmatpush1.bf16.xpose.msra.mxu0 0
    %420 = vmatprep.subr.bf16.mxu0 0
    %421 = vmatpush1.bf16.xpose.msra.mxu0 0
    %422 = vmatprep.subr.bf16.mxu0 0
    %423 = vmatpush1.bf16.xpose.msra.mxu0 %v408
    %424 = vmatprep.subr.bf16.mxu0 0
    %425 = vmatpush1.bf16.xpose.msra.mxu0 %v405
    %426 = vmatprep.subr.bf16.mxu0 0
    %427 = vmatpush2.bf16.xpose.msra.mxu0 0
    %428 = vmatprep.subr.bf16.mxu0 0
    %429 = vmatpush2.bf16.xpose.msra.mxu0 0
    %430 = vmatprep.subr.bf16.mxu0 0
    %431 = vmatpush2.bf16.xpose.msra.mxu0 0
    %432 = vmatprep.subr.bf16.mxu0 0
    %433 = vmatpush2.bf16.xpose.msra.mxu0 0
    %434 = vmatprep.subr.bf16.mxu0 0
    %435 = vmatpush2.bf16.xpose.msra.mxu0 0
    %436 = vmatprep.subr.bf16.mxu0 0
    %437 = vmatpush2.bf16.xpose.msra.mxu0 0
    %438 = vmatprep.subr.bf16.mxu0 0
    %439 = vmatpush2.bf16.xpose.msra.mxu0 0
    %440 = vmatprep.subr.bf16.mxu0 0
    %441 = vmatpush2.bf16.xpose.msra.mxu0 0
    %442 = vmatprep.mubr.bf16.mxu0 0
    %443 = vmatmul.mubr.bf16.gmra.mxu0 %v402
    %v444 = vpop.f32.mrf.mxu0
    %v445 = vadd.f32 0.0, %v444
    %v446 = vpop.f32.mrf.mxu0
    %v447 = vpop.f32.mrf.mxu0
    %v448 = vpop.f32.mrf.mxu0
    %449 = vdwg.mxu0
    %v450 = vpack.c.bf16 %v394, %v394
    %v451 = vpack.c.bf16 %v445, %v445
    %v452 = vld [vmem:[#allocation2] sm:$0xf]
    %v453 = vld [vmem:[#allocation2 + $0x4] sm:$0xf]
    %v454 = vld [vmem:[#allocation2 + $0x8] sm:$0xf]
    %v455 = vld [vmem:[#allocation2 + $0xc] sm:$0xf]
    %v458 = vunpack.c.l.b16 %v450
    %v459 = vunpack.c.l.b16 %v451
    %v460 = vpack.c.b16 %v459, %v458
    %v465 = vunpack.c.l.b16 %v452
    %v466 = vunpack.c.l.b16 %v453
    %v467 = vunpack.c.l.b16 %v454
    %v468 = vunpack.c.l.b16 %v455
    %v469 = vpack.c.b16 %v466, %v465
    %v470 = vpack.c.b16 %v468, %v467
    %v474 = vsel %vm53, %v460, 0
    %476 = vmatprep.subr.bf16.mxu0 0
    %477 = vmatpush1.bf16.msra.mxu0 0
    %478 = vmatprep.subr.bf16.mxu0 0
    %479 = vmatpush1.bf16.msra.mxu0 0
    %480 = vmatprep.subr.bf16.mxu0 0
    %481 = vmatpush1.bf16.msra.mxu0 0
    %482 = vmatprep.subr.bf16.mxu0 0
    %483 = vmatpush1.bf16.msra.mxu0 0
    %484 = vmatprep.subr.bf16.mxu0 0
    %485 = vmatpush1.bf16.msra.mxu0 0
    %486 = vmatprep.subr.bf16.mxu0 0
    %487 = vmatpush1.bf16.msra.mxu0 0
    %488 = vmatprep.subr.bf16.mxu0 0
    %489 = vmatpush1.bf16.msra.mxu0 %v470
    %490 = vmatprep.subr.bf16.mxu0 0
    %491 = vmatpush1.bf16.msra.mxu0 %v469
    %492 = vmatprep.subr.bf16.mxu0 0
    %493 = vmatpush2.bf16.msra.mxu0 0
    %494 = vmatprep.subr.bf16.mxu0 0
    %495 = vmatpush2.bf16.msra.mxu0 0
    %496 = vmatprep.subr.bf16.mxu0 0
    %497 = vmatpush2.bf16.msra.mxu0 0
    %498 = vmatprep.subr.bf16.mxu0 0
    %499 = vmatpush2.bf16.msra.mxu0 0
    %500 = vmatprep.subr.bf16.mxu0 0
    %501 = vmatpush2.bf16.msra.mxu0 0
    %502 = vmatprep.subr.bf16.mxu0 0
    %503 = vmatpush2.bf16.msra.mxu0 0
    %504 = vmatprep.subr.bf16.mxu0 0
    %505 = vmatpush2.bf16.msra.mxu0 0
    %506 = vmatprep.subr.bf16.mxu0 0
    %507 = vmatpush2.bf16.msra.mxu0 0
    %508 = vmatprep.mubr.bf16.mxu0 0
    %509 = vmatmul.mubr.bf16.gmra.mxu0 %v474
    %v510 = vpop.f32.mrf.mxu0
    %v511 = vadd.f32 0.0, %v510
    %v512 = vpop.f32.mrf.mxu0
    %v513 = vpop.f32.mrf.mxu0
    %v514 = vadd.f32 0.0, %v513
    %v515 = vpop.f32.mrf.mxu0
    %516 = vdwg.mxu0
    %v517 = vpack.c.bf16 %v511, %v511
    %v518 = vpack.c.bf16 %v514, %v514
    %519 = vst [vmem:[#allocation5] sm:$0xf] %v517
    %520 = vst [vmem:[#allocation5 + $0x4] sm:$0xf] %v518
    // Predicated region
    $region18: #{attention_layer.1} parent=1 // pred_check
      _
    $region19: #{attention_layer.1} parent=1 // pred_check_branch
      %522 = sbr.rel (0) target = $region21
    $region20: #{attention_layer.1} parent=1 // pred_region
      %s524 = ssub.s32 128, 128
      %525 = vsyncadd [#allocation4], %s524
      %s526 = sshll.u32 [#allocation5], 4
      %s527 = int_to_ptr.vmem [resolvable:$true] %s526
      %532 = dma.vmem_to_hbm [thread:$0]  %s527, 128, %s3, [#allocation4], 64, 64, 4
    $region21: #{attention_layer.1} parent=1 // pred_fallthru
      _
    // Predicated region
    $region22: #{attention_layer.1} parent=1 // pred_check
      _
    $region23: #{attention_layer.1} parent=1 // pred_check_branch
      %534 = sbr.rel (0) target = $region25
    $region24: #{attention_layer.1} parent=1 // pred_region
      %535 = dma.done [#allocation4], 128
    $region25: #{attention_layer.1} parent=1 // pred_fallthru
      _
    %536 = vsyncpa [#allocation3], 1
    %537 = vsyncpa [#allocation4], 1

</llo_original>
